<compile_context>
chip_gen: v7x
topology: tpu7x:2x2x1
jax: 0.10.0
libtpu: 0.0.40
codegen_flags: <defaults>
</compile_context>

<pallas_src>
import math
import numpy as np

import jax
import jax.numpy as jnp
from jax.experimental import pallas as pl
from jax.experimental.pallas import tpu as pltpu


def _se_block_kernel(x_ref, wdt_ref, bd_ref, wu_ref, bu_ref, o_ref):
    # x_ref   : (B, C, HW)  batch block, HW on the 128-lane axis
    # wdt_ref : (C, I)      down-projection weight, transposed (Wd^T)
    # bd_ref  : (1, I)      down-projection bias (row)
    # wu_ref  : (C, I)      up-projection weight
    # bu_ref  : (C, 1)      up-projection bias (column)
    # o_ref   : (B, C, HW)
    xf = x_ref[...].astype(jnp.float32)                         # (B, C, HW)

    # Squeeze: global average over the spatial (lane) axis -> per-channel mean.
    inv_hw = 1.0 / xf.shape[-1]
    mean = jnp.sum(xf, axis=-1, keepdims=True) * inv_hw         # (B, C, 1)

    # Excite, layer 1 (1x1 down conv + ReLU):  z = relu(Wd @ mean + bd).
    # Broadcast-multiply (VPU) + sublane reduce (XLU); no tiny MXU pushes.
    z = jnp.sum(mean * wdt_ref[...][None], axis=1, keepdims=True)   # (B, 1, I)
    z = jnp.maximum(z + bd_ref[...][None], 0.0)                     # (B, 1, I)

    # Excite, layer 2 (1x1 up conv + sigmoid):  s = sigmoid(Wu @ z + bu).
    s = jnp.sum(z * wu_ref[...][None], axis=-1, keepdims=True)      # (B, C, 1)
    s = jax.nn.sigmoid(s + bu_ref[...][None])                       # (B, C, 1)

    # Scale: per-(b, c) gate broadcast across the lane (spatial) axis.
    o_ref[...] = (xf * s).astype(o_ref.dtype)


def se_block_forward(x_nchw, w_down, b_down, w_up, b_up,
                     *, block_bytes_budget=2 << 20):
    """x_nchw: (N, C, H, W); w_down: (I, C); b_down: (I,);
    w_up: (C, I); b_up: (C,).  Returns (N, C, H, W)."""
    N, C, H, W = x_nchw.shape
    assert H == W, "SEBlock uses avg_pool2d(kernel_size=W); assumes square input"
    I = w_down.shape[0]
    HW = H * W

    # Free, contiguous reshape: channels on sublanes, spatial on lanes.
    x3 = x_nchw.reshape(N, C, HW)
    wdt = jnp.transpose(w_down.reshape(I, C))      # (C, I)
    bd2 = b_down.reshape(1, I)
    wu2 = w_up.reshape(C, I)
    bu2 = b_up.reshape(C, 1)

    # Pack as many batch elements per grid step as fit a ~2 MiB block
    # (amortizes the per-grid-step overhead; one step for small batches).
    row_bytes = C * HW * x3.dtype.itemsize
    bblk = int(max(1, min(N, block_bytes_budget // max(row_bytes, 1))))
    grid = (pl.cdiv(N, bblk),)

    # 2x double-buffered in + out blocks + f32 working copies + slack.
    need = 6 * bblk * row_bytes + (2 << 20)
    vmem_limit = min(need, 100 << 20) if need > (32 << 20) else None
    # TODO(synk): for H*W so large that a single (1, C, HW) block exceeds VMEM,
    # split into a reduce-scales pass + a scale-apply pass tiled over H*W.

    out3 = pl.pallas_call(
        _se_block_kernel,
        out_shape=jax.ShapeDtypeStruct((N, C, HW), x_nchw.dtype),
        grid=grid,
        in_specs=[
            pl.BlockSpec((bblk, C, HW), lambda n: (n, 0, 0)),
            pl.BlockSpec((C, I), lambda n: (0, 0)),
            pl.BlockSpec((1, I), lambda n: (0, 0)),
            pl.BlockSpec((C, I), lambda n: (0, 0)),
            pl.BlockSpec((C, 1), lambda n: (0, 0)),
        ],
        out_specs=pl.BlockSpec((bblk, C, HW), lambda n: (n, 0, 0)),
        compiler_params=pltpu.CompilerParams(
            dimension_semantics=("parallel",),
            vmem_limit_bytes=vmem_limit),
    )(x3, wdt, bd2, wu2, bu2)

    return out3.reshape(N, C, H, W)


def se_block_reference(x, w_down, b_down, w_up, b_up):
    """Pure-JAX reference, identical math to the PyTorch module (H == W)."""
    mean = jnp.mean(x, axis=(2, 3))                          # (N, C)
    z = jnp.maximum(mean @ w_down.T + b_down, 0.0)           # (N, I)
    s = jax.nn.sigmoid(z @ w_up.T + b_up)                    # (N, C)
    return x * s[:, :, None, None]


if __name__ == "__main__":
    # Small config consistent with the module: SEBlock(input_channels=16,
    # internal_neurons=4), batch=2, 16x16 spatial.
    N, C, H, W = 2, 16, 16, 16
    I = 4

    key = jax.random.PRNGKey(0)
    kx, k1, k2, k3, k4 = jax.random.split(key, 5)
    x = jax.random.normal(kx, (N, C, H, W), jnp.float32)

    # Conv2d(kernel_size=1) default init: U(-1/sqrt(fan_in), 1/sqrt(fan_in)).
    bound_d = 1.0 / math.sqrt(C)
    w_down = jax.random.uniform(k1, (I, C), jnp.float32, -bound_d, bound_d)
    b_down = jax.random.uniform(k2, (I,), jnp.float32, -bound_d, bound_d)
    bound_u = 1.0 / math.sqrt(I)
    w_up = jax.random.uniform(k3, (C, I), jnp.float32, -bound_u, bound_u)
    b_up = jax.random.uniform(k4, (C,), jnp.float32, -bound_u, bound_u)

    y = se_block_forward(x, w_down, b_down, w_up, b_up)
    y = jax.block_until_ready(y)

    y_ref = se_block_reference(x, w_down, b_down, w_up, b_up)
    y_ref = jax.block_until_ready(y_ref)

    assert y.shape == y_ref.shape
    np.testing.assert_allclose(np.asarray(y), np.asarray(y_ref),
                               rtol=1e-5, atol=1e-5)
    print("KERNEL_OK")
</pallas_src>

<mosaic_0001>
module attributes {stable_mosaic.version = 11 : i64} {
  func.func @_se_block_kernel(%arg0: i32, %arg1: memref<2x16x256xf32, #tpu.memory_space<vmem>>, %arg2: memref<16x4xf32, #tpu.memory_space<vmem>>, %arg3: memref<1x4xf32, #tpu.memory_space<vmem>>, %arg4: memref<16x4xf32, #tpu.memory_space<vmem>>, %arg5: memref<16x1xf32, #tpu.memory_space<vmem>>, %arg6: memref<2x16x256xf32, #tpu.memory_space<vmem>>) attributes {dimension_semantics = [#tpu.dimension_semantics<parallel>], iteration_bounds = array<i64: 1>, scalar_prefetch = 0 : i64, scratch_operands = 0 : i64, tpu.core_type = #tpu.core_type<tc>, window_params = [{transform_indices = @transform_0, window_bounds = array<i64: 2, 16, 256>}, {pipeline_mode = #tpu.pipeline_mode<synchronous>, transform_indices = @transform_1, window_bounds = array<i64: 16, 4>}, {pipeline_mode = #tpu.pipeline_mode<synchronous>, transform_indices = @transform_2, window_bounds = array<i64: 1, 4>}, {pipeline_mode = #tpu.pipeline_mode<synchronous>, transform_indices = @transform_3, window_bounds = array<i64: 16, 4>}, {pipeline_mode = #tpu.pipeline_mode<synchronous>, transform_indices = @transform_4, window_bounds = array<i64: 16, 1>}, {transform_indices = @transform_5, window_bounds = array<i64: 2, 16, 256>}]} {
    %c0 = arith.constant 0 : index
    %c0_0 = arith.constant 0 : index
    %c0_1 = arith.constant 0 : index
    %0 = vector.load %arg1[%c0, %c0_0, %c0_1] : memref<2x16x256xf32, #tpu.memory_space<vmem>>, vector<2x16x256xf32>
    %cst = arith.constant dense<0.000000e+00> : vector<2x16xf32>
    %1 = vector.multi_reduction <add>, %0, %cst [2] : vector<2x16x256xf32> to vector<2x16xf32>
    %2 = vector.shape_cast %1 : vector<2x16xf32> to vector<2x16x1xf32>
    %cst_2 = arith.constant 3.906250e-03 : f32
    %3 = vector.broadcast %cst_2 : f32 to vector<2x16x1xf32>
    %4 = arith.mulf %2, %3 : vector<2x16x1xf32>
    %c0_3 = arith.constant 0 : index
    %c0_4 = arith.constant 0 : index
    %5 = vector.load %arg2[%c0_3, %c0_4] : memref<16x4xf32, #tpu.memory_space<vmem>>, vector<16x4xf32>
    %6 = vector.shape_cast %5 : vector<16x4xf32> to vector<1x16x4xf32>
    %7 = vector.broadcast %4 : vector<2x16x1xf32> to vector<2x16x4xf32>
    %8 = vector.broadcast %6 : vector<1x16x4xf32> to vector<2x16x4xf32>
    %9 = arith.mulf %7, %8 : vector<2x16x4xf32>
    %cst_5 = arith.constant dense<0.000000e+00> : vector<2x4xf32>
    %10 = vector.multi_reduction <add>, %9, %cst_5 [1] : vector<2x16x4xf32> to vector<2x4xf32>
    %11 = vector.shape_cast %10 : vector<2x4xf32> to vector<2x1x4xf32>
    %c0_6 = arith.constant 0 : index
    %c0_7 = arith.constant 0 : index
    %12 = vector.load %arg3[%c0_6, %c0_7] : memref<1x4xf32, #tpu.memory_space<vmem>>, vector<1x4xf32>
    %13 = vector.shape_cast %12 : vector<1x4xf32> to vector<1x1x4xf32>
    %14 = vector.broadcast %13 : vector<1x1x4xf32> to vector<2x1x4xf32>
    %15 = arith.addf %11, %14 : vector<2x1x4xf32>
    %cst_8 = arith.constant 0.000000e+00 : f32
    %16 = vector.broadcast %cst_8 : f32 to vector<2x1x4xf32>
    %17 = arith.maximumf %15, %16 : vector<2x1x4xf32>
    %c0_9 = arith.constant 0 : index
    %c0_10 = arith.constant 0 : index
    %18 = vector.load %arg4[%c0_9, %c0_10] : memref<16x4xf32, #tpu.memory_space<vmem>>, vector<16x4xf32>
    %19 = vector.shape_cast %18 : vector<16x4xf32> to vector<1x16x4xf32>
    %20 = vector.broadcast %17 : vector<2x1x4xf32> to vector<2x16x4xf32>
    %21 = vector.broadcast %19 : vector<1x16x4xf32> to vector<2x16x4xf32>
    %22 = arith.mulf %20, %21 : vector<2x16x4xf32>
    %cst_11 = arith.constant dense<0.000000e+00> : vector<2x16xf32>
    %23 = vector.multi_reduction <add>, %22, %cst_11 [2] : vector<2x16x4xf32> to vector<2x16xf32>
    %24 = vector.shape_cast %23 : vector<2x16xf32> to vector<2x16x1xf32>
    %c0_12 = arith.constant 0 : index
    %c0_13 = arith.constant 0 : index
    %25 = vector.load %arg5[%c0_12, %c0_13] : memref<16x1xf32, #tpu.memory_space<vmem>>, vector<16x1xf32>
    %26 = vector.shape_cast %25 : vector<16x1xf32> to vector<1x16x1xf32>
    %27 = vector.broadcast %26 : vector<1x16x1xf32> to vector<2x16x1xf32>
    %28 = arith.addf %24, %27 : vector<2x16x1xf32>
    %29 = arith.negf %28 : vector<2x16x1xf32>
    %30 = math.exp %29 : vector<2x16x1xf32>
    %cst_14 = arith.constant 1.000000e+00 : f32
    %31 = vector.broadcast %cst_14 : f32 to vector<2x16x1xf32>
    %32 = arith.addf %31, %30 : vector<2x16x1xf32>
    %33 = arith.divf %31, %32 : vector<2x16x1xf32>
    %34 = vector.broadcast %33 : vector<2x16x1xf32> to vector<2x16x256xf32>
    %35 = arith.mulf %0, %34 : vector<2x16x256xf32>
    %c0_15 = arith.constant 0 : index
    %c0_16 = arith.constant 0 : index
    %c0_17 = arith.constant 0 : index
    %36 = vector.load %arg6[%c0_15, %c0_16, %c0_17] : memref<2x16x256xf32, #tpu.memory_space<vmem>>, vector<2x16x256xf32>
    tpu.vector_store %arg6[%c0_15, %c0_16, %c0_17], %35 {strides = array<i32>} : memref<2x16x256xf32, #tpu.memory_space<vmem>>, vector<2x16x256xf32>,
    return
  }
  func.func @transform_0(%arg0: i32) -> (i32, i32, i32) {
    %c0_i32 = arith.constant 0 : i32
    %c0_i32_0 = arith.constant 0 : i32
    %c0_i32_1 = arith.constant 0 : i32
    return %arg0, %c0_i32, %c0_i32_0 : i32, i32, i32
  }
  func.func @transform_1(%arg0: i32) -> (i32, i32) {
    %c0_i32 = arith.constant 0 : i32
    %c0_i32_0 = arith.constant 0 : i32
    %c0_i32_1 = arith.constant 0 : i32
    return %c0_i32, %c0_i32_0 : i32, i32
  }
  func.func @transform_2(%arg0: i32) -> (i32, i32) {
    %c0_i32 = arith.constant 0 : i32
    %c0_i32_0 = arith.constant 0 : i32
    %c0_i32_1 = arith.constant 0 : i32
    return %c0_i32, %c0_i32_0 : i32, i32
  }
  func.func @transform_3(%arg0: i32) -> (i32, i32) {
    %c0_i32 = arith.constant 0 : i32
    %c0_i32_0 = arith.constant 0 : i32
    %c0_i32_1 = arith.constant 0 : i32
    return %c0_i32, %c0_i32_0 : i32, i32
  }
  func.func @transform_4(%arg0: i32) -> (i32, i32) {
    %c0_i32 = arith.constant 0 : i32
    %c0_i32_0 = arith.constant 0 : i32
    %c0_i32_1 = arith.constant 0 : i32
    return %c0_i32, %c0_i32_0 : i32, i32
  }
  func.func @transform_5(%arg0: i32) -> (i32, i32, i32) {
    %c0_i32 = arith.constant 0 : i32
    %c0_i32_0 = arith.constant 0 : i32
    %c0_i32_1 = arith.constant 0 : i32
    return %arg0, %c0_i32, %c0_i32_0 : i32, i32, i32
  }
}

</mosaic_0001>

<llo_original>
// kernel: tpu_custom_call.1
$region0: #{tpu_custom_call.1}
  #allocation0 [shape = 'u32[]', space=smem, size = 0x4, offset = 0x4, fixed_abs, tag = 'smem constant byte address 0x4 - core index']
  #allocation1 [shape = 'u32[144,128]{1,0:T(1,128)}', space=vmem, size = 0x12000, scoped, tag = 'internal scratch']
  %s0 = inlined_call_operand.hbm [shape: f32[2,16,256], index: 0, kind: input, shape index: {}]
  %s1 = inlined_call_operand.vmem [shape: f32[16,4], index: 1, kind: input, shape index: {}]
  %s2 = inlined_call_operand.vmem [shape: f32[1,4], index: 2, kind: input, shape index: {}]
  %s3 = inlined_call_operand.vmem [shape: f32[16,4], index: 3, kind: input, shape index: {}]
  %s4 = inlined_call_operand.vmem [shape: f32[16,1], index: 4, kind: input, shape index: {}]
  %s5 = inlined_call_operand.hbm [shape: f32[2,16,256], index: 5, kind: output, shape index: {}]
  %s6 = sld [smem:[#allocation0]]
  $region34: #{tpu_custom_call.1} parent=0
    _
  %s8 = ssub.s32 1, %s6
  %s9 = scalar_select 0, %s8, %s6
  $region1: #{tpu_custom_call.1} parent=0
    #allocation2 [shape = 'u8[32768]{0}', space=vmem, size = 0x8000, scoped, tag = 'input window, operand 0, single buffered']
    #allocation3 [shape = 's32[1]{0}', space=sflag, size = 0x4, scoped, tag = 'scoped memory for tpu_custom_call.1']
    #allocation4 [shape = 's32[1]{0}', space=sflag, size = 0x4, scoped, tag = 'scoped memory for tpu_custom_call.1']
    #allocation5 [shape = 'u8[32768]{0}', space=vmem, size = 0x8000, scoped, tag = 'output window, operand 0, single buffered']
    %10 = vsyncpa [#allocation3], 0
    %11 = vsyncpa [#allocation4], 0
    // Predicated region
    $region2: #{tpu_custom_call.1} parent=1 // pred_check
      _
    $region3: #{tpu_custom_call.1} parent=1 // pred_check_branch
      %13 = sbr.rel (0) target = $region5
    $region4: #{tpu_custom_call.1} parent=1 // pred_region
      %s15 = ssub.s32 1024, 1024
      %16 = vsyncadd [#allocation3], %s15
      %s17 = sshll.u32 [#allocation2], 4
      %s18 = int_to_ptr.vmem [resolvable:$true] %s17
      %23 = dma.hbm_to_vmem [thread:$0]  %s0, 1024, %s18, [#allocation3], 256, 256, 16
    $region5: #{tpu_custom_call.1} parent=1 // pred_fallthru
      _
    // Predicated region
    $region6: #{tpu_custom_call.1} parent=1 // pred_check
      _
    $region7: #{tpu_custom_call.1} parent=1 // pred_check_branch
      %25 = sbr.rel (0) target = $region9
    $region8: #{tpu_custom_call.1} parent=1 // pred_region
      _
    $region9: #{tpu_custom_call.1} parent=1 // pred_fallthru
      _
    // Predicated region
    $region10: #{tpu_custom_call.1} parent=1 // pred_check
      _
    $region11: #{tpu_custom_call.1} parent=1 // pred_check_branch
      %27 = sbr.rel (0) target = $region13
    $region12: #{tpu_custom_call.1} parent=1 // pred_region
      _
    $region13: #{tpu_custom_call.1} parent=1 // pred_fallthru
      _
    // Predicated region
    $region14: #{tpu_custom_call.1} parent=1 // pred_check
      _
    $region15: #{tpu_custom_call.1} parent=1 // pred_check_branch
      %29 = sbr.rel (0) target = $region17
    $region16: #{tpu_custom_call.1} parent=1 // pred_region
      _
    $region17: #{tpu_custom_call.1} parent=1 // pred_fallthru
      _
    // Predicated region
    $region18: #{tpu_custom_call.1} parent=1 // pred_check
      _
    $region19: #{tpu_custom_call.1} parent=1 // pred_check_branch
      %31 = sbr.rel (0) target = $region21
    $region20: #{tpu_custom_call.1} parent=1 // pred_region
      _
    $region21: #{tpu_custom_call.1} parent=1 // pred_fallthru
      _
    // Predicated region
    $region22: #{tpu_custom_call.1} parent=1 // pred_check
      _
    $region23: #{tpu_custom_call.1} parent=1 // pred_check_branch
      %33 = sbr.rel (0) target = $region25
    $region24: #{tpu_custom_call.1} parent=1 // pred_region
      %34 = dma.done [#allocation3], 1024
    $region25: #{tpu_custom_call.1} parent=1 // pred_fallthru
      _
    %v35 = vld [vmem:[#allocation2] sm:$0xff]
    %v36 = vld [vmem:[#allocation2 + $0x8] sm:$0xff]
    %v37 = vld [vmem:[#allocation2 + $0x10] sm:$0xff]
    %v38 = vld [vmem:[#allocation2 + $0x18] sm:$0xff]
    %v39 = vld [vmem:[#allocation2 + $0x20] sm:$0xff]
    %v40 = vld [vmem:[#allocation2 + $0x28] sm:$0xff]
    %v41 = vld [vmem:[#allocation2 + $0x30] sm:$0xff]
    %v42 = vld [vmem:[#allocation2 + $0x38] sm:$0xff]
    %v43 = vadd.f32 %v35, %v36
    %44 = vadd.xlane.f32.xlu0 %v43
    %v45 = vpop.xlane.xlu0 %44
    %v46 = vadd.f32 %v37, %v38
    %47 = vadd.xlane.f32.xlu0 %v46
    %v48 = vpop.xlane.xlu0 %47
    %v49 = vadd.f32 %v39, %v40
    %50 = vadd.xlane.f32.xlu0 %v49
    %v51 = vpop.xlane.xlu0 %50
    %v52 = vadd.f32 %v41, %v42
    %53 = vadd.xlane.f32.xlu0 %v52
    %v54 = vpop.xlane.xlu0 %53
    %v55 = vmul.f32 %v45, 0.00390625
    %v56 = vmul.f32 %v48, 0.00390625
    %v57 = vmul.f32 %v51, 0.00390625
    %v58 = vmul.f32 %v54, 0.00390625
    %v59 = vld [vmem:[%s1] sm:$0xff]
    %v60 = vld [vmem:[%s1 + $0x8] sm:$0xff]
    %v61 = vmul.f32 %v55, %v59
    %v62 = vmul.f32 %v56, %v60
    %v63 = vmul.f32 %v57, %v59
    %v64 = vmul.f32 %v58, %v60
    %vm65 = vcmask 31744
    %v66 = vsel %vm65, %v61, 0.0
    %v67 = vsel %vm65, %v62, 0.0
    %v68 = vadd.f32 %v66, %v67
    %v69 = vrot.slane %v68, 4
    %v70 = vadd.f32 %v68, %v69
    %v71 = vrot.slane %v70, 2
    %v72 = vadd.f32 %v70, %v71
    %v73 = vrot.slane %v72, 1
    %v74 = vadd.f32 %v72, %v73
    %v75 = vsel %vm65, %v63, 0.0
    %v76 = vsel %vm65, %v64, 0.0
    %v77 = vadd.f32 %v75, %v76
    %v78 = vrot.slane %v77, 4
    %v79 = vadd.f32 %v77, %v78
    %v80 = vrot.slane %v79, 2
    %v81 = vadd.f32 %v79, %v80
    %v82 = vrot.slane %v81, 1
    %v83 = vadd.f32 %v81, %v82
    %v84 = vld [vmem:[%s2] sm:$0x1]
    %v85 = vadd.f32 %v74, %v84
    %v86 = vadd.f32 %v83, %v84
    %v87 = vmax.f32 %v85, 0.0
    %v88 = vmax.f32 %v86, 0.0
    %v89 = vld [vmem:[%s3] sm:$0xff]
    %v90 = vld [vmem:[%s3 + $0x8] sm:$0xff]
    %v91 = vlaneseq
    %v92 = vshrl.u32 %v91, 7
    %v93 = vsub.s32 0, %v92
    %v94 = vrot.slane %v87, %v93
    %v95 = vlaneseq
    %v96 = vshrl.u32 %v95, 7
    %v97 = vsub.s32 0, %v96
    %v98 = vrot.slane %v88, %v97
    %v99 = vmul.f32 %v94, %v89
    %v100 = vmul.f32 %v94, %v90
    %v101 = vmul.f32 %v98, %v89
    %v102 = vmul.f32 %v98, %v90
    %v103 = vsel %vm65, %v99, 0.0
    %104 = vadd.xlane.f32.xlu0 %v103
    %v105 = vpop.xlane.xlu0 %104
    %v106 = vsel %vm65, %v100, 0.0
    %107 = vadd.xlane.f32.xlu0 %v106
    %v108 = vpop.xlane.xlu0 %107
    %v109 = vsel %vm65, %v101, 0.0
    %110 = vadd.xlane.f32.xlu0 %v109
    %v111 = vpop.xlane.xlu0 %110
    %v112 = vsel %vm65, %v102, 0.0
    %113 = vadd.xlane.f32.xlu0 %v112
    %v114 = vpop.xlane.xlu0 %113
    %v115 = vld [vmem:[%s4] sm:$0xff]
    %v116 = vld [vmem:[%s4 + $0x8] sm:$0xff]
    %v117 = vadd.f32 %v105, %v115
    %v118 = vadd.f32 %v108, %v116
    %v119 = vadd.f32 %v111, %v115
    %v120 = vadd.f32 %v114, %v116
    %v121 = vxor.u32 %v117, 2147483648
    %v122 = vxor.u32 %v118, 2147483648
    %v123 = vxor.u32 %v119, 2147483648
    %v124 = vxor.u32 %v120, 2147483648
    %v125 = vmul.f32 %v121, 1.442695
    %v126 = vpow.pop %v125
    %v127 = vmul.f32 %v122, 1.442695
    %v128 = vpow.pop %v127
    %v129 = vmul.f32 %v123, 1.442695
    %v130 = vpow.pop %v129
    %v131 = vmul.f32 %v124, 1.442695
    %v132 = vpow.pop %v131
    %v133 = vadd.f32 %v126, 1.0
    %v134 = vadd.f32 %v128, 1.0
    %v135 = vadd.f32 %v130, 1.0
    %v136 = vadd.f32 %v132, 1.0
    %v137 = vrcp.pop %v133
    %v138 = vmul.f32 1.0, %v137
    %v139 = vrcp.pop %v134
    %v140 = vmul.f32 1.0, %v139
    %v141 = vrcp.pop %v135
    %v142 = vmul.f32 1.0, %v141
    %v143 = vrcp.pop %v136
    %v144 = vmul.f32 1.0, %v143
    %146 = vset.pattern.permute.xlu0 0
    %147 = vperm.xlu0 %146, %v138
    %v148 = vpop.permute.xlu0 %147
    %151 = vset.pattern.permute.xlu0 0
    %152 = vperm.xlu0 %151, %v140
    %v153 = vpop.permute.xlu0 %152
    %156 = vset.pattern.permute.xlu0 0
    %157 = vperm.xlu0 %156, %v142
    %v158 = vpop.permute.xlu0 %157
    %161 = vset.pattern.permute.xlu0 0
    %162 = vperm.xlu0 %161, %v144
    %v163 = vpop.permute.xlu0 %162
    %v165 = vmul.f32 %v35, %v148
    %v166 = vmul.f32 %v36, %v148
    %v167 = vmul.f32 %v37, %v153
    %v168 = vmul.f32 %v38, %v153
    %v169 = vmul.f32 %v39, %v158
    %v170 = vmul.f32 %v40, %v158
    %v171 = vmul.f32 %v41, %v163
    %v172 = vmul.f32 %v42, %v163
    %173 = vst [vmem:[#allocation5] sm:$0xff] %v165
    %174 = vst [vmem:[#allocation5 + $0x8] sm:$0xff] %v166
    %175 = vst [vmem:[#allocation5 + $0x10] sm:$0xff] %v167
    %176 = vst [vmem:[#allocation5 + $0x18] sm:$0xff] %v168
    %177 = vst [vmem:[#allocation5 + $0x20] sm:$0xff] %v169
    %178 = vst [vmem:[#allocation5 + $0x28] sm:$0xff] %v170
    %179 = vst [vmem:[#allocation5 + $0x30] sm:$0xff] %v171
    %180 = vst [vmem:[#allocation5 + $0x38] sm:$0xff] %v172
    // Predicated region
    $region26: #{tpu_custom_call.1} parent=1 // pred_check
      _
    $region27: #{tpu_custom_call.1} parent=1 // pred_check_branch
      %182 = sbr.rel (0) target = $region29
    $region28: #{tpu_custom_call.1} parent=1 // pred_region
      %s184 = ssub.s32 1024, 1024
      %185 = vsyncadd [#allocation4], %s184
      %s186 = sshll.u32 [#allocation5], 4
      %s187 = int_to_ptr.vmem [resolvable:$true] %s186
      %192 = dma.vmem_to_hbm [thread:$0]  %s187, 1024, %s5, [#allocation4], 256, 256, 16
    $region29: #{tpu_custom_call.1} parent=1 // pred_fallthru
      _
    // Predicated region
    $region30: #{tpu_custom_call.1} parent=1 // pred_check
      _
    $region31: #{tpu_custom_call.1} parent=1 // pred_check_branch
      %194 = sbr.rel (0) target = $region33
    $region32: #{tpu_custom_call.1} parent=1 // pred_region
      %195 = dma.done [#allocation4], 1024
    $region33: #{tpu_custom_call.1} parent=1 // pred_fallthru
      _
    %196 = vsyncpa [#allocation3], 1
    %197 = vsyncpa [#allocation4], 1

</llo_original>
